<compile_context>
chip_gen: v6e
topology: v6e:2x2x1
jax: 0.10.0
libtpu: 0.0.40
codegen_flags: <defaults>
</compile_context>

<pallas_src>
import jax
import jax.numpy as jnp
from jax.experimental import pallas as pl
from jax.experimental.pallas import tpu as pltpu

NEG_SLOPE = 0.01  # nn.LeakyReLU() default negative_slope


def _leaky(v):
    return jnp.where(v > 0, v, NEG_SLOPE * v)


def cnn1d_kernel(x_ref, w1_ref, b1_ref, w2_ref, b2_ref, fcw_ref, fcb_ref, o_ref):
    # x_ref: (5, TB) f32 — sequence on sublanes, batch on lanes (lane-dense).
    x = x_ref[...]
    rows = [x[t:t + 1, :] for t in range(5)]              # five (1, TB) rows

    # --- conv1: Conv1d(1 -> 2, k=2), valid -> 2 ch x 4 pos, LeakyReLU ---
    h1 = [[None] * 4 for _ in range(2)]
    for o in range(2):
        w_a = w1_ref[o, 0]
        w_b = w1_ref[o, 1]
        b = b1_ref[o]
        for p in range(4):
            acc = rows[p] * w_a + b                       # bias folded into first tap
            acc = acc + rows[p + 1] * w_b
            h1[o][p] = _leaky(acc)                        # (1, TB)

    # --- conv2: Conv1d(2 -> 4, k=2), valid -> 4 ch x 3 pos, LeakyReLU ---
    h2 = [[None] * 3 for _ in range(4)]
    for o in range(4):
        b = b2_ref[o]
        for p in range(3):
            acc = h1[0][p] * w2_ref[o, 0] + b             # first tap initializes acc
            acc = acc + h1[0][p + 1] * w2_ref[o, 1]
            acc = acc + h1[1][p] * w2_ref[o, 2]
            acc = acc + h1[1][p + 1] * w2_ref[o, 3]
            h2[o][p] = _leaky(acc)                        # (1, TB)

    # --- fc: Linear(12 -> 1) as 12 scalar-broadcast FMAs on the VPU.
    # Channel-major flatten index c*3 + p matches torch's x.view(B, -1).
    out = h2[0][0] * fcw_ref[0] + fcb_ref[0]
    for c in range(4):
        for p in range(3):
            if c == 0 and p == 0:
                continue
            out = out + h2[c][p] * fcw_ref[c * 3 + p]
    o_ref[...] = _leaky(out)                              # (1, TB) lane-dense store


def cnn1d_forward(x_ncl, w1, b1, w2, b2, fc_w, fc_b, block_b=1024):
    """x_ncl: (B, 1, 5) float32 — same layout as the PyTorch module input."""
    B, C, L = x_ncl.shape
    assert C == 1 and L == 5, (C, L)

    # Batch-on-lanes layout: (5, B) so batch fills the 128-wide lane axis.
    x_lb = jnp.transpose(x_ncl.reshape(B, L)).astype(jnp.float32)   # (5, B)

    # Lane-dense batch tile (multiple of 128); pad B up to a whole number of tiles.
    tb = max(128, min(block_b, ((B + 127) // 128) * 128))
    b_pad = ((B + tb - 1) // tb) * tb
    if b_pad != B:
        x_lb = jnp.pad(x_lb, ((0, 0), (0, b_pad - B)))

    w1_f = w1.reshape(2, 2).astype(jnp.float32)     # (out_ch, k)
    b1_f = b1.astype(jnp.float32)                   # (2,)
    w2_f = w2.reshape(4, 4).astype(jnp.float32)     # (out_ch, in_ch*k)
    b2_f = b2.astype(jnp.float32)                   # (4,)
    fcw_f = fc_w.reshape(12).astype(jnp.float32)    # channel-major flat order
    fcb_f = fc_b.reshape(1).astype(jnp.float32)     # (1,)

    smem = pl.BlockSpec(memory_space=pltpu.MemorySpace.SMEM)

    out = pl.pallas_call(
        cnn1d_kernel,
        out_shape=jax.ShapeDtypeStruct((1, b_pad), jnp.float32),
        grid_spec=pltpu.PrefetchScalarGridSpec(
            num_scalar_prefetch=0,
            grid=(b_pad // tb,),
            in_specs=[pl.BlockSpec((5, tb), lambda i: (0, i)),
                      smem, smem, smem, smem, smem, smem],
            out_specs=pl.BlockSpec((1, tb), lambda i: (0, i)),
        ),
        compiler_params=pltpu.CompilerParams(
            dimension_semantics=("parallel",)),
    )(x_lb, w1_f, b1_f, w2_f, b2_f, fcw_f, fcb_f)

    return out[0, :B].reshape(B, 1)


def cnn1d_reference(x_ncl, w1, b1, w2, b2, fc_w, fc_b):
    """Pure-JAX reference of the PyTorch forward (for verification)."""
    h = jax.lax.conv_general_dilated(
        x_ncl, w1, (1,), 'VALID', dimension_numbers=('NCH', 'OIH', 'NCH'))
    h = _leaky(h + b1[None, :, None])
    h = jax.lax.conv_general_dilated(
        h, w2, (1,), 'VALID', dimension_numbers=('NCH', 'OIH', 'NCH'))
    h = _leaky(h + b2[None, :, None])
    flat = h.reshape(h.shape[0], -1)
    return _leaky(flat @ fc_w.T + fc_b[None, :])


if __name__ == "__main__":
    key = jax.random.PRNGKey(0)
    k_x, k_w1, k_b1, k_w2, k_b2, k_fw, k_fb = jax.random.split(key, 7)

    B, L = 8, 5  # Linear(4*3, 1) implies conv2 output length 3 -> L = 5
    x = jax.random.normal(k_x, (B, 1, L), dtype=jnp.float32)

    # Deterministic parameter init (shapes from the nn.Module __init__).
    w1 = jax.random.uniform(k_w1, (2, 1, 2), jnp.float32, -0.5, 0.5)
    b1 = jax.random.uniform(k_b1, (2,), jnp.float32, -0.5, 0.5)
    w2 = jax.random.uniform(k_w2, (4, 2, 2), jnp.float32, -0.5, 0.5)
    b2 = jax.random.uniform(k_b2, (4,), jnp.float32, -0.5, 0.5)
    fc_w = jax.random.uniform(k_fw, (1, 12), jnp.float32, -0.3, 0.3)
    fc_b = jax.random.uniform(k_fb, (1,), jnp.float32, -0.3, 0.3)

    out = cnn1d_forward(x, w1, b1, w2, b2, fc_w, fc_b)
    out = jax.block_until_ready(out)

    ref = cnn1d_reference(x, w1, b1, w2, b2, fc_w, fc_b)
    assert out.shape == (B, 1), out.shape
    assert jnp.allclose(out, ref, atol=1e-5, rtol=1e-5), (out, ref)

    print("KERNEL_OK")
</pallas_src>

<mosaic_0001>
module attributes {stable_mosaic.version = 11 : i64} {
  func.func @cnn1d_kernel(%arg0: i32, %arg1: memref<5x128xf32, #tpu.memory_space<vmem>>, %arg2: memref<2x2xf32, #tpu.memory_space<smem>>, %arg3: memref<2xf32, #tpu.memory_space<smem>>, %arg4: memref<4x4xf32, #tpu.memory_space<smem>>, %arg5: memref<4xf32, #tpu.memory_space<smem>>, %arg6: memref<12xf32, #tpu.memory_space<smem>>, %arg7: memref<1xf32, #tpu.memory_space<smem>>, %arg8: memref<1x128xf32, #tpu.memory_space<vmem>>) attributes {dimension_semantics = [#tpu.dimension_semantics<parallel>], iteration_bounds = array<i64: 1>, scalar_prefetch = 0 : i64, scratch_operands = 0 : i64, tpu.core_type = #tpu.core_type<tc>, window_params = [{transform_indices = @transform_0, window_bounds = array<i64: 5, 128>}, {transform_indices = @transform_1, window_bounds = array<i64: 2, 2>}, {transform_indices = @transform_2, window_bounds = array<i64: 2>}, {transform_indices = @transform_3, window_bounds = array<i64: 4, 4>}, {transform_indices = @transform_4, window_bounds = array<i64: 4>}, {transform_indices = @transform_5, window_bounds = array<i64: 12>}, {transform_indices = @transform_6, window_bounds = array<i64: 1>}, {transform_indices = @transform_7, window_bounds = array<i64: 1, 128>}]} {
    %c0 = arith.constant 0 : index
    %c0_0 = arith.constant 0 : index
    %0 = vector.load %arg1[%c0, %c0_0] : memref<5x128xf32, #tpu.memory_space<vmem>>, vector<5x128xf32>
    %1 = vector.extract_strided_slice %0 {offsets = [0, 0], sizes = [1, 128], strides = [1, 1]} : vector<5x128xf32> to vector<1x128xf32>
    %2 = vector.extract_strided_slice %0 {offsets = [1, 0], sizes = [1, 128], strides = [1, 1]} : vector<5x128xf32> to vector<1x128xf32>
    %3 = vector.extract_strided_slice %0 {offsets = [2, 0], sizes = [1, 128], strides = [1, 1]} : vector<5x128xf32> to vector<1x128xf32>
    %4 = vector.extract_strided_slice %0 {offsets = [3, 0], sizes = [1, 128], strides = [1, 1]} : vector<5x128xf32> to vector<1x128xf32>
    %5 = vector.extract_strided_slice %0 {offsets = [4, 0], sizes = [1, 128], strides = [1, 1]} : vector<5x128xf32> to vector<1x128xf32>
    %c0_1 = arith.constant 0 : index
    %c0_2 = arith.constant 0 : index
    %6 = memref.load %arg2[%c0_1, %c0_2] : memref<2x2xf32, #tpu.memory_space<smem>>
    %c0_3 = arith.constant 0 : index
    %c1 = arith.constant 1 : index
    %7 = memref.load %arg2[%c0_3, %c1] : memref<2x2xf32, #tpu.memory_space<smem>>
    %c0_4 = arith.constant 0 : index
    %8 = memref.load %arg3[%c0_4] : memref<2xf32, #tpu.memory_space<smem>>
    %9 = vector.broadcast %6 : f32 to vector<1x128xf32>
    %10 = arith.mulf %1, %9 : vector<1x128xf32>
    %11 = vector.broadcast %8 : f32 to vector<1x128xf32>
    %12 = arith.addf %10, %11 : vector<1x128xf32>
    %13 = vector.broadcast %7 : f32 to vector<1x128xf32>
    %14 = arith.mulf %2, %13 : vector<1x128xf32>
    %15 = arith.addf %12, %14 : vector<1x128xf32>
    %cst = arith.constant 0.000000e+00 : f32
    %16 = vector.broadcast %cst : f32 to vector<1x128xf32>
    %17 = arith.cmpf ogt, %15, %16 : vector<1x128xf32>
    %cst_5 = arith.constant 0.00999999977 : f32
    %18 = vector.broadcast %cst_5 : f32 to vector<1x128xf32>
    %19 = arith.mulf %18, %15 : vector<1x128xf32>
    %20 = arith.select %17, %15, %19 : vector<1x128xi1>, vector<1x128xf32>
    %21 = vector.broadcast %6 : f32 to vector<1x128xf32>
    %22 = arith.mulf %2, %21 : vector<1x128xf32>
    %23 = vector.broadcast %8 : f32 to vector<1x128xf32>
    %24 = arith.addf %22, %23 : vector<1x128xf32>
    %25 = vector.broadcast %7 : f32 to vector<1x128xf32>
    %26 = arith.mulf %3, %25 : vector<1x128xf32>
    %27 = arith.addf %24, %26 : vector<1x128xf32>
    %cst_6 = arith.constant 0.000000e+00 : f32
    %28 = vector.broadcast %cst_6 : f32 to vector<1x128xf32>
    %29 = arith.cmpf ogt, %27, %28 : vector<1x128xf32>
    %cst_7 = arith.constant 0.00999999977 : f32
    %30 = vector.broadcast %cst_7 : f32 to vector<1x128xf32>
    %31 = arith.mulf %30, %27 : vector<1x128xf32>
    %32 = arith.select %29, %27, %31 : vector<1x128xi1>, vector<1x128xf32>
    %33 = vector.broadcast %6 : f32 to vector<1x128xf32>
    %34 = arith.mulf %3, %33 : vector<1x128xf32>
    %35 = vector.broadcast %8 : f32 to vector<1x128xf32>
    %36 = arith.addf %34, %35 : vector<1x128xf32>
    %37 = vector.broadcast %7 : f32 to vector<1x128xf32>
    %38 = arith.mulf %4, %37 : vector<1x128xf32>
    %39 = arith.addf %36, %38 : vector<1x128xf32>
    %cst_8 = arith.constant 0.000000e+00 : f32
    %40 = vector.broadcast %cst_8 : f32 to vector<1x128xf32>
    %41 = arith.cmpf ogt, %39, %40 : vector<1x128xf32>
    %cst_9 = arith.constant 0.00999999977 : f32
    %42 = vector.broadcast %cst_9 : f32 to vector<1x128xf32>
    %43 = arith.mulf %42, %39 : vector<1x128xf32>
    %44 = arith.select %41, %39, %43 : vector<1x128xi1>, vector<1x128xf32>
    %45 = vector.broadcast %6 : f32 to vector<1x128xf32>
    %46 = arith.mulf %4, %45 : vector<1x128xf32>
    %47 = vector.broadcast %8 : f32 to vector<1x128xf32>
    %48 = arith.addf %46, %47 : vector<1x128xf32>
    %49 = vector.broadcast %7 : f32 to vector<1x128xf32>
    %50 = arith.mulf %5, %49 : vector<1x128xf32>
    %51 = arith.addf %48, %50 : vector<1x128xf32>
    %cst_10 = arith.constant 0.000000e+00 : f32
    %52 = vector.broadcast %cst_10 : f32 to vector<1x128xf32>
    %53 = arith.cmpf ogt, %51, %52 : vector<1x128xf32>
    %cst_11 = arith.constant 0.00999999977 : f32
    %54 = vector.broadcast %cst_11 : f32 to vector<1x128xf32>
    %55 = arith.mulf %54, %51 : vector<1x128xf32>
    %56 = arith.select %53, %51, %55 : vector<1x128xi1>, vector<1x128xf32>
    %c1_12 = arith.constant 1 : index
    %c0_13 = arith.constant 0 : index
    %57 = memref.load %arg2[%c1_12, %c0_13] : memref<2x2xf32, #tpu.memory_space<smem>>
    %c1_14 = arith.constant 1 : index
    %c1_15 = arith.constant 1 : index
    %58 = memref.load %arg2[%c1_14, %c1_15] : memref<2x2xf32, #tpu.memory_space<smem>>
    %c1_16 = arith.constant 1 : index
    %59 = memref.load %arg3[%c1_16] : memref<2xf32, #tpu.memory_space<smem>>
    %60 = vector.broadcast %57 : f32 to vector<1x128xf32>
    %61 = arith.mulf %1, %60 : vector<1x128xf32>
    %62 = vector.broadcast %59 : f32 to vector<1x128xf32>
    %63 = arith.addf %61, %62 : vector<1x128xf32>
    %64 = vector.broadcast %58 : f32 to vector<1x128xf32>
    %65 = arith.mulf %2, %64 : vector<1x128xf32>
    %66 = arith.addf %63, %65 : vector<1x128xf32>
    %cst_17 = arith.constant 0.000000e+00 : f32
    %67 = vector.broadcast %cst_17 : f32 to vector<1x128xf32>
    %68 = arith.cmpf ogt, %66, %67 : vector<1x128xf32>
    %cst_18 = arith.constant 0.00999999977 : f32
    %69 = vector.broadcast %cst_18 : f32 to vector<1x128xf32>
    %70 = arith.mulf %69, %66 : vector<1x128xf32>
    %71 = arith.select %68, %66, %70 : vector<1x128xi1>, vector<1x128xf32>
    %72 = vector.broadcast %57 : f32 to vector<1x128xf32>
    %73 = arith.mulf %2, %72 : vector<1x128xf32>
    %74 = vector.broadcast %59 : f32 to vector<1x128xf32>
    %75 = arith.addf %73, %74 : vector<1x128xf32>
    %76 = vector.broadcast %58 : f32 to vector<1x128xf32>
    %77 = arith.mulf %3, %76 : vector<1x128xf32>
    %78 = arith.addf %75, %77 : vector<1x128xf32>
    %cst_19 = arith.constant 0.000000e+00 : f32
    %79 = vector.broadcast %cst_19 : f32 to vector<1x128xf32>
    %80 = arith.cmpf ogt, %78, %79 : vector<1x128xf32>
    %cst_20 = arith.constant 0.00999999977 : f32
    %81 = vector.broadcast %cst_20 : f32 to vector<1x128xf32>
    %82 = arith.mulf %81, %78 : vector<1x128xf32>
    %83 = arith.select %80, %78, %82 : vector<1x128xi1>, vector<1x128xf32>
    %84 = vector.broadcast %57 : f32 to vector<1x128xf32>
    %85 = arith.mulf %3, %84 : vector<1x128xf32>
    %86 = vector.broadcast %59 : f32 to vector<1x128xf32>
    %87 = arith.addf %85, %86 : vector<1x128xf32>
    %88 = vector.broadcast %58 : f32 to vector<1x128xf32>
    %89 = arith.mulf %4, %88 : vector<1x128xf32>
    %90 = arith.addf %87, %89 : vector<1x128xf32>
    %cst_21 = arith.constant 0.000000e+00 : f32
    %91 = vector.broadcast %cst_21 : f32 to vector<1x128xf32>
    %92 = arith.cmpf ogt, %90, %91 : vector<1x128xf32>
    %cst_22 = arith.constant 0.00999999977 : f32
    %93 = vector.broadcast %cst_22 : f32 to vector<1x128xf32>
    %94 = arith.mulf %93, %90 : vector<1x128xf32>
    %95 = arith.select %92, %90, %94 : vector<1x128xi1>, vector<1x128xf32>
    %96 = vector.broadcast %57 : f32 to vector<1x128xf32>
    %97 = arith.mulf %4, %96 : vector<1x128xf32>
    %98 = vector.broadcast %59 : f32 to vector<1x128xf32>
    %99 = arith.addf %97, %98 : vector<1x128xf32>
    %100 = vector.broadcast %58 : f32 to vector<1x128xf32>
    %101 = arith.mulf %5, %100 : vector<1x128xf32>
    %102 = arith.addf %99, %101 : vector<1x128xf32>
    %cst_23 = arith.constant 0.000000e+00 : f32
    %103 = vector.broadcast %cst_23 : f32 to vector<1x128xf32>
    %104 = arith.cmpf ogt, %102, %103 : vector<1x128xf32>
    %cst_24 = arith.constant 0.00999999977 : f32
    %105 = vector.broadcast %cst_24 : f32 to vector<1x128xf32>
    %106 = arith.mulf %105, %102 : vector<1x128xf32>
    %107 = arith.select %104, %102, %106 : vector<1x128xi1>, vector<1x128xf32>
    %c0_25 = arith.constant 0 : index
    %108 = memref.load %arg5[%c0_25] : memref<4xf32, #tpu.memory_space<smem>>
    %c0_26 = arith.constant 0 : index
    %c0_27 = arith.constant 0 : index
    %109 = memref.load %arg4[%c0_26, %c0_27] : memref<4x4xf32, #tpu.memory_space<smem>>
    %110 = vector.broadcast %109 : f32 to vector<1x128xf32>
    %111 = arith.mulf %20, %110 : vector<1x128xf32>
    %112 = vector.broadcast %108 : f32 to vector<1x128xf32>
    %113 = arith.addf %111, %112 : vector<1x128xf32>
    %c0_28 = arith.constant 0 : index
    %c1_29 = arith.constant 1 : index
    %114 = memref.load %arg4[%c0_28, %c1_29] : memref<4x4xf32, #tpu.memory_space<smem>>
    %115 = vector.broadcast %114 : f32 to vector<1x128xf32>
    %116 = arith.mulf %32, %115 : vector<1x128xf32>
    %117 = arith.addf %113, %116 : vector<1x128xf32>
    %c0_30 = arith.constant 0 : index
    %c2 = arith.constant 2 : index
    %118 = memref.load %arg4[%c0_30, %c2] : memref<4x4xf32, #tpu.memory_space<smem>>
    %119 = vector.broadcast %118 : f32 to vector<1x128xf32>
    %120 = arith.mulf %71, %119 : vector<1x128xf32>
    %121 = arith.addf %117, %120 : vector<1x128xf32>
    %c0_31 = arith.constant 0 : index
    %c3 = arith.constant 3 : index
    %122 = memref.load %arg4[%c0_31, %c3] : memref<4x4xf32, #tpu.memory_space<smem>>
    %123 = vector.broadcast %122 : f32 to vector<1x128xf32>
    %124 = arith.mulf %83, %123 : vector<1x128xf32>
    %125 = arith.addf %121, %124 : vector<1x128xf32>
    %cst_32 = arith.constant 0.000000e+00 : f32
    %126 = vector.broadcast %cst_32 : f32 to vector<1x128xf32>
    %127 = arith.cmpf ogt, %125, %126 : vector<1x128xf32>
    %cst_33 = arith.constant 0.00999999977 : f32
    %128 = vector.broadcast %cst_33 : f32 to vector<1x128xf32>
    %129 = arith.mulf %128, %125 : vector<1x128xf32>
    %130 = arith.select %127, %125, %129 : vector<1x128xi1>, vector<1x128xf32>
    %c0_34 = arith.constant 0 : index
    %c0_35 = arith.constant 0 : index
    %131 = memref.load %arg4[%c0_34, %c0_35] : memref<4x4xf32, #tpu.memory_space<smem>>
    %132 = vector.broadcast %131 : f32 to vector<1x128xf32>
    %133 = arith.mulf %32, %132 : vector<1x128xf32>
    %134 = vector.broadcast %108 : f32 to vector<1x128xf32>
    %135 = arith.addf %133, %134 : vector<1x128xf32>
    %c0_36 = arith.constant 0 : index
    %c1_37 = arith.constant 1 : index
    %136 = memref.load %arg4[%c0_36, %c1_37] : memref<4x4xf32, #tpu.memory_space<smem>>
    %137 = vector.broadcast %136 : f32 to vector<1x128xf32>
    %138 = arith.mulf %44, %137 : vector<1x128xf32>
    %139 = arith.addf %135, %138 : vector<1x128xf32>
    %c0_38 = arith.constant 0 : index
    %c2_39 = arith.constant 2 : index
    %140 = memref.load %arg4[%c0_38, %c2_39] : memref<4x4xf32, #tpu.memory_space<smem>>
    %141 = vector.broadcast %140 : f32 to vector<1x128xf32>
    %142 = arith.mulf %83, %141 : vector<1x128xf32>
    %143 = arith.addf %139, %142 : vector<1x128xf32>
    %c0_40 = arith.constant 0 : index
    %c3_41 = arith.constant 3 : index
    %144 = memref.load %arg4[%c0_40, %c3_41] : memref<4x4xf32, #tpu.memory_space<smem>>
    %145 = vector.broadcast %144 : f32 to vector<1x128xf32>
    %146 = arith.mulf %95, %145 : vector<1x128xf32>
    %147 = arith.addf %143, %146 : vector<1x128xf32>
    %cst_42 = arith.constant 0.000000e+00 : f32
    %148 = vector.broadcast %cst_42 : f32 to vector<1x128xf32>
    %149 = arith.cmpf ogt, %147, %148 : vector<1x128xf32>
    %cst_43 = arith.constant 0.00999999977 : f32
    %150 = vector.broadcast %cst_43 : f32 to vector<1x128xf32>
    %151 = arith.mulf %150, %147 : vector<1x128xf32>
    %152 = arith.select %149, %147, %151 : vector<1x128xi1>, vector<1x128xf32>
    %c0_44 = arith.constant 0 : index
    %c0_45 = arith.constant 0 : index
    %153 = memref.load %arg4[%c0_44, %c0_45] : memref<4x4xf32, #tpu.memory_space<smem>>
    %154 = vector.broadcast %153 : f32 to vector<1x128xf32>
    %155 = arith.mulf %44, %154 : vector<1x128xf32>
    %156 = vector.broadcast %108 : f32 to vector<1x128xf32>
    %157 = arith.addf %155, %156 : vector<1x128xf32>
    %c0_46 = arith.constant 0 : index
    %c1_47 = arith.constant 1 : index
    %158 = memref.load %arg4[%c0_46, %c1_47] : memref<4x4xf32, #tpu.memory_space<smem>>
    %159 = vector.broadcast %158 : f32 to vector<1x128xf32>
    %160 = arith.mulf %56, %159 : vector<1x128xf32>
    %161 = arith.addf %157, %160 : vector<1x128xf32>
    %c0_48 = arith.constant 0 : index
    %c2_49 = arith.constant 2 : index
    %162 = memref.load %arg4[%c0_48, %c2_49] : memref<4x4xf32, #tpu.memory_space<smem>>
    %163 = vector.broadcast %162 : f32 to vector<1x128xf32>
    %164 = arith.mulf %95, %163 : vector<1x128xf32>
    %165 = arith.addf %161, %164 : vector<1x128xf32>
    %c0_50 = arith.constant 0 : index
    %c3_51 = arith.constant 3 : index
    %166 = memref.load %arg4[%c0_50, %c3_51] : memref<4x4xf32, #tpu.memory_space<smem>>
    %167 = vector.broadcast %166 : f32 to vector<1x128xf32>
    %168 = arith.mulf %107, %167 : vector<1x128xf32>
    %169 = arith.addf %165, %168 : vector<1x128xf32>
    %cst_52 = arith.constant 0.000000e+00 : f32
    %170 = vector.broadcast %cst_52 : f32 to vector<1x128xf32>
    %171 = arith.cmpf ogt, %169, %170 : vector<1x128xf32>
    %cst_53 = arith.constant 0.00999999977 : f32
    %172 = vector.broadcast %cst_53 : f32 to vector<1x128xf32>
    %173 = arith.mulf %172, %169 : vector<1x128xf32>
    %174 = arith.select %171, %169, %173 : vector<1x128xi1>, vector<1x128xf32>
    %c1_54 = arith.constant 1 : index
    %175 = memref.load %arg5[%c1_54] : memref<4xf32, #tpu.memory_space<smem>>
    %c1_55 = arith.constant 1 : index
    %c0_56 = arith.constant 0 : index
    %176 = memref.load %arg4[%c1_55, %c0_56] : memref<4x4xf32, #tpu.memory_space<smem>>
    %177 = vector.broadcast %176 : f32 to vector<1x128xf32>
    %178 = arith.mulf %20, %177 : vector<1x128xf32>
    %179 = vector.broadcast %175 : f32 to vector<1x128xf32>
    %180 = arith.addf %178, %179 : vector<1x128xf32>
    %c1_57 = arith.constant 1 : index
    %c1_58 = arith.constant 1 : index
    %181 = memref.load %arg4[%c1_57, %c1_58] : memref<4x4xf32, #tpu.memory_space<smem>>
    %182 = vector.broadcast %181 : f32 to vector<1x128xf32>
    %183 = arith.mulf %32, %182 : vector<1x128xf32>
    %184 = arith.addf %180, %183 : vector<1x128xf32>
    %c1_59 = arith.constant 1 : index
    %c2_60 = arith.constant 2 : index
    %185 = memref.load %arg4[%c1_59, %c2_60] : memref<4x4xf32, #tpu.memory_space<smem>>
    %186 = vector.broadcast %185 : f32 to vector<1x128xf32>
    %187 = arith.mulf %71, %186 : vector<1x128xf32>
    %188 = arith.addf %184, %187 : vector<1x128xf32>
    %c1_61 = arith.constant 1 : index
    %c3_62 = arith.constant 3 : index
    %189 = memref.load %arg4[%c1_61, %c3_62] : memref<4x4xf32, #tpu.memory_space<smem>>
    %190 = vector.broadcast %189 : f32 to vector<1x128xf32>
    %191 = arith.mulf %83, %190 : vector<1x128xf32>
    %192 = arith.addf %188, %191 : vector<1x128xf32>
    %cst_63 = arith.constant 0.000000e+00 : f32
    %193 = vector.broadcast %cst_63 : f32 to vector<1x128xf32>
    %194 = arith.cmpf ogt, %192, %193 : vector<1x128xf32>
    %cst_64 = arith.constant 0.00999999977 : f32
    %195 = vector.broadcast %cst_64 : f32 to vector<1x128xf32>
    %196 = arith.mulf %195, %192 : vector<1x128xf32>
    %197 = arith.select %194, %192, %196 : vector<1x128xi1>, vector<1x128xf32>
    %c1_65 = arith.constant 1 : index
    %c0_66 = arith.constant 0 : index
    %198 = memref.load %arg4[%c1_65, %c0_66] : memref<4x4xf32, #tpu.memory_space<smem>>
    %199 = vector.broadcast %198 : f32 to vector<1x128xf32>
    %200 = arith.mulf %32, %199 : vector<1x128xf32>
    %201 = vector.broadcast %175 : f32 to vector<1x128xf32>
    %202 = arith.addf %200, %201 : vector<1x128xf32>
    %c1_67 = arith.constant 1 : index
    %c1_68 = arith.constant 1 : index
    %203 = memref.load %arg4[%c1_67, %c1_68] : memref<4x4xf32, #tpu.memory_space<smem>>
    %204 = vector.broadcast %203 : f32 to vector<1x128xf32>
    %205 = arith.mulf %44, %204 : vector<1x128xf32>
    %206 = arith.addf %202, %205 : vector<1x128xf32>
    %c1_69 = arith.constant 1 : index
    %c2_70 = arith.constant 2 : index
    %207 = memref.load %arg4[%c1_69, %c2_70] : memref<4x4xf32, #tpu.memory_space<smem>>
    %208 = vector.broadcast %207 : f32 to vector<1x128xf32>
    %209 = arith.mulf %83, %208 : vector<1x128xf32>
    %210 = arith.addf %206, %209 : vector<1x128xf32>
    %c1_71 = arith.constant 1 : index
    %c3_72 = arith.constant 3 : index
    %211 = memref.load %arg4[%c1_71, %c3_72] : memref<4x4xf32, #tpu.memory_space<smem>>
    %212 = vector.broadcast %211 : f32 to vector<1x128xf32>
    %213 = arith.mulf %95, %212 : vector<1x128xf32>
    %214 = arith.addf %210, %213 : vector<1x128xf32>
    %cst_73 = arith.constant 0.000000e+00 : f32
    %215 = vector.broadcast %cst_73 : f32 to vector<1x128xf32>
    %216 = arith.cmpf ogt, %214, %215 : vector<1x128xf32>
    %cst_74 = arith.constant 0.00999999977 : f32
    %217 = vector.broadcast %cst_74 : f32 to vector<1x128xf32>
    %218 = arith.mulf %217, %214 : vector<1x128xf32>
    %219 = arith.select %216, %214, %218 : vector<1x128xi1>, vector<1x128xf32>
    %c1_75 = arith.constant 1 : index
    %c0_76 = arith.constant 0 : index
    %220 = memref.load %arg4[%c1_75, %c0_76] : memref<4x4xf32, #tpu.memory_space<smem>>
    %221 = vector.broadcast %220 : f32 to vector<1x128xf32>
    %222 = arith.mulf %44, %221 : vector<1x128xf32>
    %223 = vector.broadcast %175 : f32 to vector<1x128xf32>
    %224 = arith.addf %222, %223 : vector<1x128xf32>
    %c1_77 = arith.constant 1 : index
    %c1_78 = arith.constant 1 : index
    %225 = memref.load %arg4[%c1_77, %c1_78] : memref<4x4xf32, #tpu.memory_space<smem>>
    %226 = vector.broadcast %225 : f32 to vector<1x128xf32>
    %227 = arith.mulf %56, %226 : vector<1x128xf32>
    %228 = arith.addf %224, %227 : vector<1x128xf32>
    %c1_79 = arith.constant 1 : index
    %c2_80 = arith.constant 2 : index
    %229 = memref.load %arg4[%c1_79, %c2_80] : memref<4x4xf32, #tpu.memory_space<smem>>
    %230 = vector.broadcast %229 : f32 to vector<1x128xf32>
    %231 = arith.mulf %95, %230 : vector<1x128xf32>
    %232 = arith.addf %228, %231 : vector<1x128xf32>
    %c1_81 = arith.constant 1 : index
    %c3_82 = arith.constant 3 : index
    %233 = memref.load %arg4[%c1_81, %c3_82] : memref<4x4xf32, #tpu.memory_space<smem>>
    %234 = vector.broadcast %233 : f32 to vector<1x128xf32>
    %235 = arith.mulf %107, %234 : vector<1x128xf32>
    %236 = arith.addf %232, %235 : vector<1x128xf32>
    %cst_83 = arith.constant 0.000000e+00 : f32
    %237 = vector.broadcast %cst_83 : f32 to vector<1x128xf32>
    %238 = arith.cmpf ogt, %236, %237 : vector<1x128xf32>
    %cst_84 = arith.constant 0.00999999977 : f32
    %239 = vector.broadcast %cst_84 : f32 to vector<1x128xf32>
    %240 = arith.mulf %239, %236 : vector<1x128xf32>
    %241 = arith.select %238, %236, %240 : vector<1x128xi1>, vector<1x128xf32>
    %c2_85 = arith.constant 2 : index
    %242 = memref.load %arg5[%c2_85] : memref<4xf32, #tpu.memory_space<smem>>
    %c2_86 = arith.constant 2 : index
    %c0_87 = arith.constant 0 : index
    %243 = memref.load %arg4[%c2_86, %c0_87] : memref<4x4xf32, #tpu.memory_space<smem>>
    %244 = vector.broadcast %243 : f32 to vector<1x128xf32>
    %245 = arith.mulf %20, %244 : vector<1x128xf32>
    %246 = vector.broadcast %242 : f32 to vector<1x128xf32>
    %247 = arith.addf %245, %246 : vector<1x128xf32>
    %c2_88 = arith.constant 2 : index
    %c1_89 = arith.constant 1 : index
    %248 = memref.load %arg4[%c2_88, %c1_89] : memref<4x4xf32, #tpu.memory_space<smem>>
    %249 = vector.broadcast %248 : f32 to vector<1x128xf32>
    %250 = arith.mulf %32, %249 : vector<1x128xf32>
    %251 = arith.addf %247, %250 : vector<1x128xf32>
    %c2_90 = arith.constant 2 : index
    %c2_91 = arith.constant 2 : index
    %252 = memref.load %arg4[%c2_90, %c2_91] : memref<4x4xf32, #tpu.memory_space<smem>>
    %253 = vector.broadcast %252 : f32 to vector<1x128xf32>
    %254 = arith.mulf %71, %253 : vector<1x128xf32>
    %255 = arith.addf %251, %254 : vector<1x128xf32>
    %c2_92 = arith.constant 2 : index
    %c3_93 = arith.constant 3 : index
    %256 = memref.load %arg4[%c2_92, %c3_93] : memref<4x4xf32, #tpu.memory_space<smem>>
    %257 = vector.broadcast %256 : f32 to vector<1x128xf32>
    %258 = arith.mulf %83, %257 : vector<1x128xf32>
    %259 = arith.addf %255, %258 : vector<1x128xf32>
    %cst_94 = arith.constant 0.000000e+00 : f32
    %260 = vector.broadcast %cst_94 : f32 to vector<1x128xf32>
    %261 = arith.cmpf ogt, %259, %260 : vector<1x128xf32>
    %cst_95 = arith.constant 0.00999999977 : f32
    %262 = vector.broadcast %cst_95 : f32 to vector<1x128xf32>
    %263 = arith.mulf %262, %259 : vector<1x128xf32>
    %264 = arith.select %261, %259, %263 : vector<1x128xi1>, vector<1x128xf32>
    %c2_96 = arith.constant 2 : index
    %c0_97 = arith.constant 0 : index
    %265 = memref.load %arg4[%c2_96, %c0_97] : memref<4x4xf32, #tpu.memory_space<smem>>
    %266 = vector.broadcast %265 : f32 to vector<1x128xf32>
    %267 = arith.mulf %32, %266 : vector<1x128xf32>
    %268 = vector.broadcast %242 : f32 to vector<1x128xf32>
    %269 = arith.addf %267, %268 : vector<1x128xf32>
    %c2_98 = arith.constant 2 : index
    %c1_99 = arith.constant 1 : index
    %270 = memref.load %arg4[%c2_98, %c1_99] : memref<4x4xf32, #tpu.memory_space<smem>>
    %271 = vector.broadcast %270 : f32 to vector<1x128xf32>
    %272 = arith.mulf %44, %271 : vector<1x128xf32>
    %273 = arith.addf %269, %272 : vector<1x128xf32>
    %c2_100 = arith.constant 2 : index
    %c2_101 = arith.constant 2 : index
    %274 = memref.load %arg4[%c2_100, %c2_101] : memref<4x4xf32, #tpu.memory_space<smem>>
    %275 = vector.broadcast %274 : f32 to vector<1x128xf32>
    %276 = arith.mulf %83, %275 : vector<1x128xf32>
    %277 = arith.addf %273, %276 : vector<1x128xf32>
    %c2_102 = arith.constant 2 : index
    %c3_103 = arith.constant 3 : index
    %278 = memref.load %arg4[%c2_102, %c3_103] : memref<4x4xf32, #tpu.memory_space<smem>>
    %279 = vector.broadcast %278 : f32 to vector<1x128xf32>
    %280 = arith.mulf %95, %279 : vector<1x128xf32>
    %281 = arith.addf %277, %280 : vector<1x128xf32>
    %cst_104 = arith.constant 0.000000e+00 : f32
    %282 = vector.broadcast %cst_104 : f32 to vector<1x128xf32>
    %283 = arith.cmpf ogt, %281, %282 : vector<1x128xf32>
    %cst_105 = arith.constant 0.00999999977 : f32
    %284 = vector.broadcast %cst_105 : f32 to vector<1x128xf32>
    %285 = arith.mulf %284, %281 : vector<1x128xf32>
    %286 = arith.select %283, %281, %285 : vector<1x128xi1>, vector<1x128xf32>
    %c2_106 = arith.constant 2 : index
    %c0_107 = arith.constant 0 : index
    %287 = memref.load %arg4[%c2_106, %c0_107] : memref<4x4xf32, #tpu.memory_space<smem>>
    %288 = vector.broadcast %287 : f32 to vector<1x128xf32>
    %289 = arith.mulf %44, %288 : vector<1x128xf32>
    %290 = vector.broadcast %242 : f32 to vector<1x128xf32>
    %291 = arith.addf %289, %290 : vector<1x128xf32>
    %c2_108 = arith.constant 2 : index
    %c1_109 = arith.constant 1 : index
    %292 = memref.load %arg4[%c2_108, %c1_109] : memref<4x4xf32, #tpu.memory_space<smem>>
    %293 = vector.broadcast %292 : f32 to vector<1x128xf32>
    %294 = arith.mulf %56, %293 : vector<1x128xf32>
    %295 = arith.addf %291, %294 : vector<1x128xf32>
    %c2_110 = arith.constant 2 : index
    %c2_111 = arith.constant 2 : index
    %296 = memref.load %arg4[%c2_110, %c2_111] : memref<4x4xf32, #tpu.memory_space<smem>>
    %297 = vector.broadcast %296 : f32 to vector<1x128xf32>
    %298 = arith.mulf %95, %297 : vector<1x128xf32>
    %299 = arith.addf %295, %298 : vector<1x128xf32>
    %c2_112 = arith.constant 2 : index
    %c3_113 = arith.constant 3 : index
    %300 = memref.load %arg4[%c2_112, %c3_113] : memref<4x4xf32, #tpu.memory_space<smem>>
    %301 = vector.broadcast %300 : f32 to vector<1x128xf32>
    %302 = arith.mulf %107, %301 : vector<1x128xf32>
    %303 = arith.addf %299, %302 : vector<1x128xf32>
    %cst_114 = arith.constant 0.000000e+00 : f32
    %304 = vector.broadcast %cst_114 : f32 to vector<1x128xf32>
    %305 = arith.cmpf ogt, %303, %304 : vector<1x128xf32>
    %cst_115 = arith.constant 0.00999999977 : f32
    %306 = vector.broadcast %cst_115 : f32 to vector<1x128xf32>
    %307 = arith.mulf %306, %303 : vector<1x128xf32>
    %308 = arith.select %305, %303, %307 : vector<1x128xi1>, vector<1x128xf32>
    %c3_116 = arith.constant 3 : index
    %309 = memref.load %arg5[%c3_116] : memref<4xf32, #tpu.memory_space<smem>>
    %c3_117 = arith.constant 3 : index
    %c0_118 = arith.constant 0 : index
    %310 = memref.load %arg4[%c3_117, %c0_118] : memref<4x4xf32, #tpu.memory_space<smem>>
    %311 = vector.broadcast %310 : f32 to vector<1x128xf32>
    %312 = arith.mulf %20, %311 : vector<1x128xf32>
    %313 = vector.broadcast %309 : f32 to vector<1x128xf32>
    %314 = arith.addf %312, %313 : vector<1x128xf32>
    %c3_119 = arith.constant 3 : index
    %c1_120 = arith.constant 1 : index
    %315 = memref.load %arg4[%c3_119, %c1_120] : memref<4x4xf32, #tpu.memory_space<smem>>
    %316 = vector.broadcast %315 : f32 to vector<1x128xf32>
    %317 = arith.mulf %32, %316 : vector<1x128xf32>
    %318 = arith.addf %314, %317 : vector<1x128xf32>
    %c3_121 = arith.constant 3 : index
    %c2_122 = arith.constant 2 : index
    %319 = memref.load %arg4[%c3_121, %c2_122] : memref<4x4xf32, #tpu.memory_space<smem>>
    %320 = vector.broadcast %319 : f32 to vector<1x128xf32>
    %321 = arith.mulf %71, %320 : vector<1x128xf32>
    %322 = arith.addf %318, %321 : vector<1x128xf32>
    %c3_123 = arith.constant 3 : index
    %c3_124 = arith.constant 3 : index
    %323 = memref.load %arg4[%c3_123, %c3_124] : memref<4x4xf32, #tpu.memory_space<smem>>
    %324 = vector.broadcast %323 : f32 to vector<1x128xf32>
    %325 = arith.mulf %83, %324 : vector<1x128xf32>
    %326 = arith.addf %322, %325 : vector<1x128xf32>
    %cst_125 = arith.constant 0.000000e+00 : f32
    %327 = vector.broadcast %cst_125 : f32 to vector<1x128xf32>
    %328 = arith.cmpf ogt, %326, %327 : vector<1x128xf32>
    %cst_126 = arith.constant 0.00999999977 : f32
    %329 = vector.broadcast %cst_126 : f32 to vector<1x128xf32>
    %330 = arith.mulf %329, %326 : vector<1x128xf32>
    %331 = arith.select %328, %326, %330 : vector<1x128xi1>, vector<1x128xf32>
    %c3_127 = arith.constant 3 : index
    %c0_128 = arith.constant 0 : index
    %332 = memref.load %arg4[%c3_127, %c0_128] : memref<4x4xf32, #tpu.memory_space<smem>>
    %333 = vector.broadcast %332 : f32 to vector<1x128xf32>
    %334 = arith.mulf %32, %333 : vector<1x128xf32>
    %335 = vector.broadcast %309 : f32 to vector<1x128xf32>
    %336 = arith.addf %334, %335 : vector<1x128xf32>
    %c3_129 = arith.constant 3 : index
    %c1_130 = arith.constant 1 : index
    %337 = memref.load %arg4[%c3_129, %c1_130] : memref<4x4xf32, #tpu.memory_space<smem>>
    %338 = vector.broadcast %337 : f32 to vector<1x128xf32>
    %339 = arith.mulf %44, %338 : vector<1x128xf32>
    %340 = arith.addf %336, %339 : vector<1x128xf32>
    %c3_131 = arith.constant 3 : index
    %c2_132 = arith.constant 2 : index
    %341 = memref.load %arg4[%c3_131, %c2_132] : memref<4x4xf32, #tpu.memory_space<smem>>
    %342 = vector.broadcast %341 : f32 to vector<1x128xf32>
    %343 = arith.mulf %83, %342 : vector<1x128xf32>
    %344 = arith.addf %340, %343 : vector<1x128xf32>
    %c3_133 = arith.constant 3 : index
    %c3_134 = arith.constant 3 : index
    %345 = memref.load %arg4[%c3_133, %c3_134] : memref<4x4xf32, #tpu.memory_space<smem>>
    %346 = vector.broadcast %345 : f32 to vector<1x128xf32>
    %347 = arith.mulf %95, %346 : vector<1x128xf32>
    %348 = arith.addf %344, %347 : vector<1x128xf32>
    %cst_135 = arith.constant 0.000000e+00 : f32
    %349 = vector.broadcast %cst_135 : f32 to vector<1x128xf32>
    %350 = arith.cmpf ogt, %348, %349 : vector<1x128xf32>
    %cst_136 = arith.constant 0.00999999977 : f32
    %351 = vector.broadcast %cst_136 : f32 to vector<1x128xf32>
    %352 = arith.mulf %351, %348 : vector<1x128xf32>
    %353 = arith.select %350, %348, %352 : vector<1x128xi1>, vector<1x128xf32>
    %c3_137 = arith.constant 3 : index
    %c0_138 = arith.constant 0 : index
    %354 = memref.load %arg4[%c3_137, %c0_138] : memref<4x4xf32, #tpu.memory_space<smem>>
    %355 = vector.broadcast %354 : f32 to vector<1x128xf32>
    %356 = arith.mulf %44, %355 : vector<1x128xf32>
    %357 = vector.broadcast %309 : f32 to vector<1x128xf32>
    %358 = arith.addf %356, %357 : vector<1x128xf32>
    %c3_139 = arith.constant 3 : index
    %c1_140 = arith.constant 1 : index
    %359 = memref.load %arg4[%c3_139, %c1_140] : memref<4x4xf32, #tpu.memory_space<smem>>
    %360 = vector.broadcast %359 : f32 to vector<1x128xf32>
    %361 = arith.mulf %56, %360 : vector<1x128xf32>
    %362 = arith.addf %358, %361 : vector<1x128xf32>
    %c3_141 = arith.constant 3 : index
    %c2_142 = arith.constant 2 : index
    %363 = memref.load %arg4[%c3_141, %c2_142] : memref<4x4xf32, #tpu.memory_space<smem>>
    %364 = vector.broadcast %363 : f32 to vector<1x128xf32>
    %365 = arith.mulf %95, %364 : vector<1x128xf32>
    %366 = arith.addf %362, %365 : vector<1x128xf32>
    %c3_143 = arith.constant 3 : index
    %c3_144 = arith.constant 3 : index
    %367 = memref.load %arg4[%c3_143, %c3_144] : memref<4x4xf32, #tpu.memory_space<smem>>
    %368 = vector.broadcast %367 : f32 to vector<1x128xf32>
    %369 = arith.mulf %107, %368 : vector<1x128xf32>
    %370 = arith.addf %366, %369 : vector<1x128xf32>
    %cst_145 = arith.constant 0.000000e+00 : f32
    %371 = vector.broadcast %cst_145 : f32 to vector<1x128xf32>
    %372 = arith.cmpf ogt, %370, %371 : vector<1x128xf32>
    %cst_146 = arith.constant 0.00999999977 : f32
    %373 = vector.broadcast %cst_146 : f32 to vector<1x128xf32>
    %374 = arith.mulf %373, %370 : vector<1x128xf32>
    %375 = arith.select %372, %370, %374 : vector<1x128xi1>, vector<1x128xf32>
    %c0_147 = arith.constant 0 : index
    %376 = memref.load %arg6[%c0_147] : memref<12xf32, #tpu.memory_space<smem>>
    %377 = vector.broadcast %376 : f32 to vector<1x128xf32>
    %378 = arith.mulf %130, %377 : vector<1x128xf32>
    %c0_148 = arith.constant 0 : index
    %379 = memref.load %arg7[%c0_148] : memref<1xf32, #tpu.memory_space<smem>>
    %380 = vector.broadcast %379 : f32 to vector<1x128xf32>
    %381 = arith.addf %378, %380 : vector<1x128xf32>
    %c1_149 = arith.constant 1 : index
    %382 = memref.load %arg6[%c1_149] : memref<12xf32, #tpu.memory_space<smem>>
    %383 = vector.broadcast %382 : f32 to vector<1x128xf32>
    %384 = arith.mulf %152, %383 : vector<1x128xf32>
    %385 = arith.addf %381, %384 : vector<1x128xf32>
    %c2_150 = arith.constant 2 : index
    %386 = memref.load %arg6[%c2_150] : memref<12xf32, #tpu.memory_space<smem>>
    %387 = vector.broadcast %386 : f32 to vector<1x128xf32>
    %388 = arith.mulf %174, %387 : vector<1x128xf32>
    %389 = arith.addf %385, %388 : vector<1x128xf32>
    %c3_151 = arith.constant 3 : index
    %390 = memref.load %arg6[%c3_151] : memref<12xf32, #tpu.memory_space<smem>>
    %391 = vector.broadcast %390 : f32 to vector<1x128xf32>
    %392 = arith.mulf %197, %391 : vector<1x128xf32>
    %393 = arith.addf %389, %392 : vector<1x128xf32>
    %c4 = arith.constant 4 : index
    %394 = memref.load %arg6[%c4] : memref<12xf32, #tpu.memory_space<smem>>
    %395 = vector.broadcast %394 : f32 to vector<1x128xf32>
    %396 = arith.mulf %219, %395 : vector<1x128xf32>
    %397 = arith.addf %393, %396 : vector<1x128xf32>
    %c5 = arith.constant 5 : index
    %398 = memref.load %arg6[%c5] : memref<12xf32, #tpu.memory_space<smem>>
    %399 = vector.broadcast %398 : f32 to vector<1x128xf32>
    %400 = arith.mulf %241, %399 : vector<1x128xf32>
    %401 = arith.addf %397, %400 : vector<1x128xf32>
    %c6 = arith.constant 6 : index
    %402 = memref.load %arg6[%c6] : memref<12xf32, #tpu.memory_space<smem>>
    %403 = vector.broadcast %402 : f32 to vector<1x128xf32>
    %404 = arith.mulf %264, %403 : vector<1x128xf32>
    %405 = arith.addf %401, %404 : vector<1x128xf32>
    %c7 = arith.constant 7 : index
    %406 = memref.load %arg6[%c7] : memref<12xf32, #tpu.memory_space<smem>>
    %407 = vector.broadcast %406 : f32 to vector<1x128xf32>
    %408 = arith.mulf %286, %407 : vector<1x128xf32>
    %409 = arith.addf %405, %408 : vector<1x128xf32>
    %c8 = arith.constant 8 : index
    %410 = memref.load %arg6[%c8] : memref<12xf32, #tpu.memory_space<smem>>
    %411 = vector.broadcast %410 : f32 to vector<1x128xf32>
    %412 = arith.mulf %308, %411 : vector<1x128xf32>
    %413 = arith.addf %409, %412 : vector<1x128xf32>
    %c9 = arith.constant 9 : index
    %414 = memref.load %arg6[%c9] : memref<12xf32, #tpu.memory_space<smem>>
    %415 = vector.broadcast %414 : f32 to vector<1x128xf32>
    %416 = arith.mulf %331, %415 : vector<1x128xf32>
    %417 = arith.addf %413, %416 : vector<1x128xf32>
    %c10 = arith.constant 10 : index
    %418 = memref.load %arg6[%c10] : memref<12xf32, #tpu.memory_space<smem>>
    %419 = vector.broadcast %418 : f32 to vector<1x128xf32>
    %420 = arith.mulf %353, %419 : vector<1x128xf32>
    %421 = arith.addf %417, %420 : vector<1x128xf32>
    %c11 = arith.constant 11 : index
    %422 = memref.load %arg6[%c11] : memref<12xf32, #tpu.memory_space<smem>>
    %423 = vector.broadcast %422 : f32 to vector<1x128xf32>
    %424 = arith.mulf %375, %423 : vector<1x128xf32>
    %425 = arith.addf %421, %424 : vector<1x128xf32>
    %cst_152 = arith.constant 0.000000e+00 : f32
    %426 = vector.broadcast %cst_152 : f32 to vector<1x128xf32>
    %427 = arith.cmpf ogt, %425, %426 : vector<1x128xf32>
    %cst_153 = arith.constant 0.00999999977 : f32
    %428 = vector.broadcast %cst_153 : f32 to vector<1x128xf32>
    %429 = arith.mulf %428, %425 : vector<1x128xf32>
    %430 = arith.select %427, %425, %429 : vector<1x128xi1>, vector<1x128xf32>
    %c0_154 = arith.constant 0 : index
    %c0_155 = arith.constant 0 : index
    %431 = vector.load %arg8[%c0_154, %c0_155] : memref<1x128xf32, #tpu.memory_space<vmem>>, vector<1x128xf32>
    tpu.vector_store %arg8[%c0_154, %c0_155], %430 {strides = array<i32>} : memref<1x128xf32, #tpu.memory_space<vmem>>, vector<1x128xf32>,
    return
  }
  func.func @transform_0(%arg0: i32) -> (i32, i32) {
    %c0_i32 = arith.constant 0 : i32
    %c0_i32_0 = arith.constant 0 : i32
    return %c0_i32, %arg0 : i32, i32
  }
  func.func @transform_1(%arg0: i32) -> (i32, i32) {
    %c0_i32 = arith.constant 0 : i32
    %c0_i32_0 = arith.constant 0 : i32
    %c0_i32_1 = arith.constant 0 : i32
    return %c0_i32, %c0_i32_0 : i32, i32
  }
  func.func @transform_2(%arg0: i32) -> i32 {
    %c0_i32 = arith.constant 0 : i32
    %c0_i32_0 = arith.constant 0 : i32
    return %c0_i32 : i32
  }
  func.func @transform_3(%arg0: i32) -> (i32, i32) {
    %c0_i32 = arith.constant 0 : i32
    %c0_i32_0 = arith.constant 0 : i32
    %c0_i32_1 = arith.constant 0 : i32
    return %c0_i32, %c0_i32_0 : i32, i32
  }
  func.func @transform_4(%arg0: i32) -> i32 {
    %c0_i32 = arith.constant 0 : i32
    %c0_i32_0 = arith.constant 0 : i32
    return %c0_i32 : i32
  }
  func.func @transform_5(%arg0: i32) -> i32 {
    %c0_i32 = arith.constant 0 : i32
    %c0_i32_0 = arith.constant 0 : i32
    return %c0_i32 : i32
  }
  func.func @transform_6(%arg0: i32) -> i32 {
    %c0_i32 = arith.constant 0 : i32
    %c0_i32_0 = arith.constant 0 : i32
    return %c0_i32 : i32
  }
  func.func @transform_7(%arg0: i32) -> (i32, i32) {
    %c0_i32 = arith.constant 0 : i32
    %c0_i32_0 = arith.constant 0 : i32
    return %c0_i32, %arg0 : i32, i32
  }
}

</mosaic_0001>

<llo_original>
// kernel: tpu_custom_call.1
$region0: #{tpu_custom_call.1}
  #allocation0 [shape = 'u32[]', space=smem, size = 0x4, offset = 0x4, fixed_abs, tag = 'smem constant byte address 0x4 - core index']
  #allocation1 [shape = 'u32[144,128]{1,0:T(1,128)}', space=vmem, size = 0x12000, scoped, tag = 'internal scratch']
  #allocation2 [shape = 'f32[1]{0:T(128)S(6)}', space=smem, size = 0x200, scoped, tag = 'scoped memory for tpu_custom_call.1']
  %s0 = inlined_call_operand.hbm [shape: f32[5,128], index: 0, kind: input, shape index: {}]
  %s1 = inlined_call_operand.vmem [shape: f32[2,2], index: 1, kind: input, shape index: {}]
  %s2 = inlined_call_operand.vmem [shape: f32[2], index: 2, kind: input, shape index: {}]
  %s3 = inlined_call_operand.vmem [shape: f32[4,4], index: 3, kind: input, shape index: {}]
  %s4 = inlined_call_operand.vmem [shape: f32[4], index: 4, kind: input, shape index: {}]
  %s5 = inlined_call_operand.vmem [shape: f32[12], index: 5, kind: input, shape index: {}]
  %s6 = inlined_call_operand.<no memory space> [shape: f32[1], index: 6, kind: input, shape index: {}]
  %s7 = inlined_call_operand.hbm [shape: f32[1,128], index: 7, kind: output, shape index: {}]
  %s8 = sld [smem:[#allocation0]]
  $region62: #{tpu_custom_call.1} parent=0
    _
  %s10 = ssub.s32 1, %s8
  %s11 = scalar_select 0, %s10, %s8
  %12 = sst [smem:[#allocation2]] %s6
  $region1: #{tpu_custom_call.1} parent=0
    #allocation3 [shape = 'u8[4096]{0}', space=vmem, size = 0x1000, scoped, tag = 'input window, operand 0, single buffered']
    #allocation4 [shape = 's32[1]{0}', space=sflag, size = 0x4, scoped, tag = 'scoped memory for tpu_custom_call.1']
    #allocation5 [shape = 's32[1]{0}', space=sflag, size = 0x4, scoped, tag = 'scoped memory for tpu_custom_call.1']
    #allocation6 [shape = 's32[1]{0}', space=sflag, size = 0x4, scoped, tag = 'scoped memory for tpu_custom_call.1']
    #allocation7 [shape = 'u8[1024]{0}', space=smem, size = 0x400, scoped, tag = 'input window, operand 1, single buffered']
    #allocation8 [shape = 'u8[512]{0}', space=smem, size = 0x200, scoped, tag = 'input window, operand 2, single buffered']
    #allocation9 [shape = 's32[1]{0}', space=sflag, size = 0x4, scoped, tag = 'scoped memory for tpu_custom_call.1']
    #allocation10 [shape = 'u8[2048]{0}', space=smem, size = 0x800, scoped, tag = 'input window, operand 3, single buffered']
    #allocation11 [shape = 'u8[512]{0}', space=smem, size = 0x200, scoped, tag = 'input window, operand 4, single buffered']
    #allocation12 [shape = 's32[1]{0}', space=sflag, size = 0x4, scoped, tag = 'scoped memory for tpu_custom_call.1']
    #allocation13 [shape = 'u8[512]{0}', space=smem, size = 0x200, scoped, tag = 'input window, operand 5, single buffered']
    #allocation14 [shape = 'u8[512]{0}', space=vmem, size = 0x400, scoped, tag = 'output window, operand 0, single buffered']
    %13 = vsyncpa [#allocation4], 0
    %14 = vsyncpa [#allocation6], 0
    %15 = vsyncpa [#allocation9], 0
    %16 = vsyncpa [#allocation12], 0
    %17 = vsyncpa [#allocation5], 0
    // Predicated region
    $region2: #{tpu_custom_call.1} parent=1 // pred_check
      _
    $region3: #{tpu_custom_call.1} parent=1 // pred_check_branch
      %19 = sbr.rel (0) target = $region5
    $region4: #{tpu_custom_call.1} parent=1 // pred_region
      %s21 = ssub.s32 128, 128
      %22 = vsyncadd [#allocation4], %s21
      %s24 = sshll.u32 [#allocation3], 4
      %s25 = int_to_ptr.vmem [resolvable:$true] %s24
      %27 = dma.hbm_to_vmem [thread:$0]  %s0, 128, %s25, [#allocation4]
    $region5: #{tpu_custom_call.1} parent=1 // pred_fallthru
      _
    // Predicated region
    $region6: #{tpu_custom_call.1} parent=1 // pred_check
      _
    $region7: #{tpu_custom_call.1} parent=1 // pred_check_branch
      %29 = sbr.rel (0) target = $region9
    $region8: #{tpu_custom_call.1} parent=1 // pred_region
      %s31 = ssub.s32 32, 32
      %32 = vsyncadd [#allocation6], %s31
      %s34 = sshll.u32 %s1, 4
      %s35 = int_to_ptr.vmem [resolvable:$true] %s34
      %37 = dma.vmem_to_smem %s35, 32, [#allocation7], [#allocation6]
    $region9: #{tpu_custom_call.1} parent=1 // pred_fallthru
      _
    // Predicated region
    $region10: #{tpu_custom_call.1} parent=1 // pred_check
      _
    $region11: #{tpu_custom_call.1} parent=1 // pred_check_branch
      %39 = sbr.rel (0) target = $region13
    $region12: #{tpu_custom_call.1} parent=1 // pred_region
      %s41 = ssub.s32 16, 16
      %42 = vsyncadd [#allocation9], %s41
      %s44 = sshll.u32 %s2, 4
      %s45 = int_to_ptr.vmem [resolvable:$true] %s44
      %47 = dma.vmem_to_smem %s45, 16, [#allocation8], [#allocation9]
    $region13: #{tpu_custom_call.1} parent=1 // pred_fallthru
      _
    // Predicated region
    $region14: #{tpu_custom_call.1} parent=1 // pred_check
      _
    $region15: #{tpu_custom_call.1} parent=1 // pred_check_branch
      %49 = sbr.rel (0) target = $region17
    $region16: #{tpu_custom_call.1} parent=1 // pred_region
      %s51 = ssub.s32 64, 64
      %52 = vsyncadd [#allocation9], %s51
      %s54 = sshll.u32 %s3, 4
      %s55 = int_to_ptr.vmem [resolvable:$true] %s54
      %57 = dma.vmem_to_smem %s55, 64, [#allocation10], [#allocation9]
    $region17: #{tpu_custom_call.1} parent=1 // pred_fallthru
      _
    // Predicated region
    $region18: #{tpu_custom_call.1} parent=1 // pred_check
      _
    $region19: #{tpu_custom_call.1} parent=1 // pred_check_branch
      %59 = sbr.rel (0) target = $region21
    $region20: #{tpu_custom_call.1} parent=1 // pred_region
      %s61 = ssub.s32 16, 16
      %62 = vsyncadd [#allocation12], %s61
      %s64 = sshll.u32 %s4, 4
      %s65 = int_to_ptr.vmem [resolvable:$true] %s64
      %67 = dma.vmem_to_smem %s65, 16, [#allocation11], [#allocation12]
    $region21: #{tpu_custom_call.1} parent=1 // pred_fallthru
      _
    // Predicated region
    $region22: #{tpu_custom_call.1} parent=1 // pred_check
      _
    $region23: #{tpu_custom_call.1} parent=1 // pred_check_branch
      %69 = sbr.rel (0) target = $region25
    $region24: #{tpu_custom_call.1} parent=1 // pred_region
      %s71 = ssub.s32 16, 16
      %72 = vsyncadd [#allocation12], %s71
      %s74 = sshll.u32 %s5, 4
      %s75 = int_to_ptr.vmem [resolvable:$true] %s74
      %77 = dma.vmem_to_smem %s75, 16, [#allocation13], [#allocation12]
    $region25: #{tpu_custom_call.1} parent=1 // pred_fallthru
      _
    // Predicated region
    $region26: #{tpu_custom_call.1} parent=1 // pred_check
      _
    $region27: #{tpu_custom_call.1} parent=1 // pred_check_branch
      %79 = sbr.rel (0) target = $region29
    $region28: #{tpu_custom_call.1} parent=1 // pred_region
      _
    $region29: #{tpu_custom_call.1} parent=1 // pred_fallthru
      _
    // Predicated region
    $region30: #{tpu_custom_call.1} parent=1 // pred_check
      _
    $region31: #{tpu_custom_call.1} parent=1 // pred_check_branch
      %81 = sbr.rel (0) target = $region33
    $region32: #{tpu_custom_call.1} parent=1 // pred_region
      %82 = dma.done [#allocation4], 128
    $region33: #{tpu_custom_call.1} parent=1 // pred_fallthru
      _
    // Predicated region
    $region34: #{tpu_custom_call.1} parent=1 // pred_check
      _
    $region35: #{tpu_custom_call.1} parent=1 // pred_check_branch
      %84 = sbr.rel (0) target = $region37
    $region36: #{tpu_custom_call.1} parent=1 // pred_region
      %85 = dma.done [#allocation6], 32
    $region37: #{tpu_custom_call.1} parent=1 // pred_fallthru
      _
    // Predicated region
    $region38: #{tpu_custom_call.1} parent=1 // pred_check
      _
    $region39: #{tpu_custom_call.1} parent=1 // pred_check_branch
      %87 = sbr.rel (0) target = $region41
    $region40: #{tpu_custom_call.1} parent=1 // pred_region
      %88 = dma.done [#allocation9], 16
    $region41: #{tpu_custom_call.1} parent=1 // pred_fallthru
      _
    // Predicated region
    $region42: #{tpu_custom_call.1} parent=1 // pred_check
      _
    $region43: #{tpu_custom_call.1} parent=1 // pred_check_branch
      %90 = sbr.rel (0) target = $region45
    $region44: #{tpu_custom_call.1} parent=1 // pred_region
      %91 = dma.done [#allocation9], 64
    $region45: #{tpu_custom_call.1} parent=1 // pred_fallthru
      _
    // Predicated region
    $region46: #{tpu_custom_call.1} parent=1 // pred_check
      _
    $region47: #{tpu_custom_call.1} parent=1 // pred_check_branch
      %93 = sbr.rel (0) target = $region49
    $region48: #{tpu_custom_call.1} parent=1 // pred_region
      %94 = dma.done [#allocation12], 16
    $region49: #{tpu_custom_call.1} parent=1 // pred_fallthru
      _
    // Predicated region
    $region50: #{tpu_custom_call.1} parent=1 // pred_check
      _
    $region51: #{tpu_custom_call.1} parent=1 // pred_check_branch
      %96 = sbr.rel (0) target = $region53
    $region52: #{tpu_custom_call.1} parent=1 // pred_region
      %97 = dma.done [#allocation12], 16
    $region53: #{tpu_custom_call.1} parent=1 // pred_fallthru
      _
    %98 = sfence
    %v99 = vld [vmem:[#allocation3] sm:$0x1f]
    %s100 = sld [smem:[#allocation7]]
    %s101 = sld [smem:[#allocation7 + $0x1]]
    %s102 = sld [smem:[#allocation8]]
    %v103 = vstv %s100
    %v104 = vmul.f32 %v99, %v103
    %v105 = vstv %s102
    %v106 = vadd.f32 %v104, %v105
    %v107 = vstv %s101
    %v108 = vmul.f32 %v99, %v107
    %v110 = vrot.slane %v108, 1
    %v112 = vadd.f32 %v106, %v110
    %vm113 = vcmp.gt.f32.partialorder %v112, 0.0
    %v114 = vmul.f32 %v112, 0.01
    %v115 = vsel %vm113, %v112, %v114
    %s116 = sld [smem:[#allocation7 + $0x80]]
    %s117 = sld [smem:[#allocation7 + $0x81]]
    %s118 = sld [smem:[#allocation8 + $0x1]]
    %v119 = vstv %s116
    %v120 = vmul.f32 %v99, %v119
    %v121 = vstv %s118
    %v122 = vadd.f32 %v120, %v121
    %v123 = vstv %s117
    %v124 = vmul.f32 %v99, %v123
    %v126 = vrot.slane %v124, 1
    %v128 = vadd.f32 %v122, %v126
    %vm129 = vcmp.gt.f32.partialorder %v128, 0.0
    %v130 = vmul.f32 %v128, 0.01
    %v131 = vsel %vm129, %v128, %v130
    %s132 = sld [smem:[#allocation11]]
    %s133 = sld [smem:[#allocation10]]
    %v134 = vstv %s133
    %v135 = vmul.f32 %v115, %v134
    %v136 = vstv %s132
    %v137 = vadd.f32 %v135, %v136
    %s138 = sld [smem:[#allocation10 + $0x1]]
    %v139 = vstv %s138
    %v140 = vmul.f32 %v115, %v139
    %v142 = vrot.slane %v140, 1
    %v144 = vadd.f32 %v137, %v142
    %s145 = sld [smem:[#allocation10 + $0x2]]
    %v146 = vstv %s145
    %v147 = vmul.f32 %v131, %v146
    %v148 = vadd.f32 %v144, %v147
    %s149 = sld [smem:[#allocation10 + $0x3]]
    %v150 = vstv %s149
    %v151 = vmul.f32 %v131, %v150
    %v153 = vrot.slane %v151, 1
    %v155 = vadd.f32 %v148, %v153
    %vm156 = vcmp.gt.f32.partialorder %v155, 0.0
    %v157 = vmul.f32 %v155, 0.01
    %v158 = vsel %vm156, %v155, %v157
    %s159 = sld [smem:[#allocation11 + $0x1]]
    %s160 = sld [smem:[#allocation10 + $0x80]]
    %v161 = vstv %s160
    %v162 = vmul.f32 %v115, %v161
    %v163 = vstv %s159
    %v164 = vadd.f32 %v162, %v163
    %s165 = sld [smem:[#allocation10 + $0x81]]
    %v166 = vstv %s165
    %v167 = vmul.f32 %v115, %v166
    %v169 = vrot.slane %v167, 1
    %v171 = vadd.f32 %v164, %v169
    %s172 = sld [smem:[#allocation10 + $0x82]]
    %v173 = vstv %s172
    %v174 = vmul.f32 %v131, %v173
    %v175 = vadd.f32 %v171, %v174
    %s176 = sld [smem:[#allocation10 + $0x83]]
    %v177 = vstv %s176
    %v178 = vmul.f32 %v131, %v177
    %v180 = vrot.slane %v178, 1
    %v182 = vadd.f32 %v175, %v180
    %vm183 = vcmp.gt.f32.partialorder %v182, 0.0
    %v184 = vmul.f32 %v182, 0.01
    %v185 = vsel %vm183, %v182, %v184
    %s186 = sld [smem:[#allocation11 + $0x2]]
    %s187 = sld [smem:[#allocation10 + $0x100]]
    %v188 = vstv %s187
    %v189 = vmul.f32 %v115, %v188
    %v190 = vstv %s186
    %v191 = vadd.f32 %v189, %v190
    %s192 = sld [smem:[#allocation10 + $0x101]]
    %v193 = vstv %s192
    %v194 = vmul.f32 %v115, %v193
    %v196 = vrot.slane %v194, 1
    %v198 = vadd.f32 %v191, %v196
    %s199 = sld [smem:[#allocation10 + $0x102]]
    %v200 = vstv %s199
    %v201 = vmul.f32 %v131, %v200
    %v202 = vadd.f32 %v198, %v201
    %s203 = sld [smem:[#allocation10 + $0x103]]
    %v204 = vstv %s203
    %v205 = vmul.f32 %v131, %v204
    %v207 = vrot.slane %v205, 1
    %v209 = vadd.f32 %v202, %v207
    %vm210 = vcmp.gt.f32.partialorder %v209, 0.0
    %v211 = vmul.f32 %v209, 0.01
    %v212 = vsel %vm210, %v209, %v211
    %s213 = sld [smem:[#allocation11 + $0x3]]
    %s214 = sld [smem:[#allocation10 + $0x180]]
    %v215 = vstv %s214
    %v216 = vmul.f32 %v115, %v215
    %v217 = vstv %s213
    %v218 = vadd.f32 %v216, %v217
    %s219 = sld [smem:[#allocation10 + $0x181]]
    %v220 = vstv %s219
    %v221 = vmul.f32 %v115, %v220
    %v223 = vrot.slane %v221, 1
    %v225 = vadd.f32 %v218, %v223
    %s226 = sld [smem:[#allocation10 + $0x182]]
    %v227 = vstv %s226
    %v228 = vmul.f32 %v131, %v227
    %v229 = vadd.f32 %v225, %v228
    %s230 = sld [smem:[#allocation10 + $0x183]]
    %v231 = vstv %s230
    %v232 = vmul.f32 %v131, %v231
    %v234 = vrot.slane %v232, 1
    %v236 = vadd.f32 %v229, %v234
    %vm237 = vcmp.gt.f32.partialorder %v236, 0.0
    %v238 = vmul.f32 %v236, 0.01
    %v239 = vsel %vm237, %v236, %v238
    %s240 = sld [smem:[#allocation13]]
    %v241 = vstv %s240
    %v242 = vmul.f32 %v158, %v241
    %s243 = sld [smem:[#allocation2]]
    %v244 = vstv %s243
    %v245 = vadd.f32 %v242, %v244
    %s246 = sld [smem:[#allocation13 + $0x1]]
    %v247 = vstv %s246
    %v248 = vmul.f32 %v158, %v247
    %v250 = vrot.slane %v248, 1
    %v252 = vadd.f32 %v245, %v250
    %s253 = sld [smem:[#allocation13 + $0x2]]
    %v254 = vstv %s253
    %v255 = vmul.f32 %v158, %v254
    %v257 = vrot.slane %v255, 2
    %v259 = vadd.f32 %v252, %v257
    %s260 = sld [smem:[#allocation13 + $0x3]]
    %v261 = vstv %s260
    %v262 = vmul.f32 %v185, %v261
    %v263 = vadd.f32 %v259, %v262
    %s264 = sld [smem:[#allocation13 + $0x4]]
    %v265 = vstv %s264
    %v266 = vmul.f32 %v185, %v265
    %v268 = vrot.slane %v266, 1
    %v270 = vadd.f32 %v263, %v268
    %s271 = sld [smem:[#allocation13 + $0x5]]
    %v272 = vstv %s271
    %v273 = vmul.f32 %v185, %v272
    %v275 = vrot.slane %v273, 2
    %v277 = vadd.f32 %v270, %v275
    %s278 = sld [smem:[#allocation13 + $0x6]]
    %v279 = vstv %s278
    %v280 = vmul.f32 %v212, %v279
    %v281 = vadd.f32 %v277, %v280
    %s282 = sld [smem:[#allocation13 + $0x7]]
    %v283 = vstv %s282
    %v284 = vmul.f32 %v212, %v283
    %v286 = vrot.slane %v284, 1
    %v288 = vadd.f32 %v281, %v286
    %s289 = sld [smem:[#allocation13 + $0x8]]
    %v290 = vstv %s289
    %v291 = vmul.f32 %v212, %v290
    %v293 = vrot.slane %v291, 2
    %v295 = vadd.f32 %v288, %v293
    %s296 = sld [smem:[#allocation13 + $0x9]]
    %v297 = vstv %s296
    %v298 = vmul.f32 %v239, %v297
    %v299 = vadd.f32 %v295, %v298
    %s300 = sld [smem:[#allocation13 + $0xa]]
    %v301 = vstv %s300
    %v302 = vmul.f32 %v239, %v301
    %v304 = vrot.slane %v302, 1
    %v306 = vadd.f32 %v299, %v304
    %s307 = sld [smem:[#allocation13 + $0xb]]
    %v308 = vstv %s307
    %v309 = vmul.f32 %v239, %v308
    %v311 = vrot.slane %v309, 2
    %v313 = vadd.f32 %v306, %v311
    %vm314 = vcmp.gt.f32.partialorder %v313, 0.0
    %v315 = vmul.f32 %v313, 0.01
    %v316 = vsel %vm314, %v313, %v315
    %317 = vst [vmem:[#allocation14] sm:$0x1] %v316
    // Predicated region
    $region54: #{tpu_custom_call.1} parent=1 // pred_check
      _
    $region55: #{tpu_custom_call.1} parent=1 // pred_check_branch
      %319 = sbr.rel (0) target = $region57
    $region56: #{tpu_custom_call.1} parent=1 // pred_region
      %s321 = ssub.s32 16, 16
      %322 = vsyncadd [#allocation5], %s321
      %s324 = sshll.u32 [#allocation14], 4
      %s325 = int_to_ptr.vmem [resolvable:$true] %s324
      %327 = dma.vmem_to_hbm [thread:$0]  %s325, 16, %s7, [#allocation5]
    $region57: #{tpu_custom_call.1} parent=1 // pred_fallthru
      _
    // Predicated region
    $region58: #{tpu_custom_call.1} parent=1 // pred_check
      _
    $region59: #{tpu_custom_call.1} parent=1 // pred_check_branch
      %329 = sbr.rel (0) target = $region61
    $region60: #{tpu_custom_call.1} parent=1 // pred_region
      %330 = dma.done [#allocation5], 16
    $region61: #{tpu_custom_call.1} parent=1 // pred_fallthru
      _
    %331 = vsyncpa [#allocation4], 1
    %332 = vsyncpa [#allocation5], 1
    %333 = vsyncpa [#allocation6], 1
    %334 = vsyncpa [#allocation9], 1
    %335 = vsyncpa [#allocation12], 1

</llo_original>
